<compile_context>
chip_gen: v7x
topology: tpu7x:2x2x1
jax: 0.10.0
libtpu: 0.0.40
codegen_flags: <defaults>
</compile_context>

<pallas_src>
import jax
import jax.numpy as jnp
from jax.experimental import pallas as pl
from jax.experimental.pallas import tpu as pltpu


EMBED_DIMS = 32                      # small, consistent with the module (orig 256)
GROUP_REG_DIMS = (2, 1, 3, 2, 2)     # total output dim = 10
TOTAL_OUT = sum(GROUP_REG_DIMS)
N_HEADS = len(GROUP_REG_DIMS)
HID_TOTAL = N_HEADS * EMBED_DIMS     # 160 = fused head-hidden width per row
PACK = 4                             # rows packed per 128-lane super-row
PD = PACK * EMBED_DIMS               # 128   packed input / shared-branch width
PH = PACK * HID_TOTAL                # 640   packed fused head-hidden width
PO = PACK * TOTAL_OUT                # 40    packed output width


def _round_up(x, m):
    return ((x + m - 1) // m) * m


def _reg_layer_kernel(x_ref, w1_ref, b1_ref, w2_ref, b2_ref,
                      wh_ref, bh_ref, wo_ref, bo_ref, out_ref):
    """One tile of packed rows: shared branch + fused task heads, 4 matmuls."""
    wdt = w1_ref.dtype                       # matmul operand dtype (bf16 or f32)
    # cast in-kernel (cheap VPU work hidden under MXU); accumulate/bias/ReLU f32
    x = x_ref[...].astype(wdt)               # (T, 128)

    # shared reg_branch: Linear -> ReLU -> (Dropout p=0) -> Linear -> ReLU
    h = jnp.dot(x, w1_ref[...], preferred_element_type=jnp.float32) + b1_ref[...]
    h = jnp.maximum(h, 0.0).astype(wdt)
    h = jnp.dot(h, w2_ref[...], preferred_element_type=jnp.float32) + b2_ref[...]
    reg_feat = jnp.maximum(h, 0.0).astype(wdt)          # (T, 128)

    # all 5 task-head hidden layers, 4-way block-diagonal (128 -> 640), fused
    hh = jnp.dot(reg_feat, wh_ref[...],
                 preferred_element_type=jnp.float32) + bh_ref[...]
    hh = jnp.maximum(hh, 0.0).astype(wdt)               # (T, 640)

    # all 5 task-head output layers, block-diagonal (640 -> 40); this *is* the
    # packed concatenated output, no slicing / concat needed in the kernel.
    out = jnp.dot(hh, wo_ref[...],
                  preferred_element_type=jnp.float32) + bo_ref[...]
    out_ref[...] = out.astype(out_ref.dtype)            # (T, 40)


def _block_diag(block, reps):
    """reps-way block-diagonal expansion of a 2-D weight."""
    r, c = block.shape
    out = jnp.zeros((reps * r, reps * c), block.dtype)
    for i in range(reps):
        out = out.at[i * r:(i + 1) * r, i * c:(i + 1) * c].set(block)
    return out


def fuse_params(params, compute_dtype=jnp.bfloat16):
    """Build fused, 4-row lane-packed kernel weights from the module params."""
    w1, b1, w2, b2, wh, bh, wo_list, bo_list = params
    d = EMBED_DIMS

    # shared branch: 4-way block-diagonal (128,128), biases tiled to 128 lanes
    w1_p = _block_diag(w1, PACK)
    w2_p = _block_diag(w2, PACK)
    b1_p = jnp.tile(b1, PACK).reshape(1, PD)
    b2_p = jnp.tile(b2, PACK).reshape(1, PD)

    # fused head-hidden weight: columns [i*d:(i+1)*d] belong to head i (32,160),
    # then 4-way block-diagonal -> (128, 640); 640 is already lane-aligned.
    wh_f = jnp.concatenate([wh[i] for i in range(N_HEADS)], axis=-1)   # (32,160)
    bh_f = jnp.concatenate([bh[i] for i in range(N_HEADS)], axis=-1)   # (160,)
    wh_p = _block_diag(wh_f, PACK)                                     # (128,640)
    bh_p = jnp.tile(bh_f, PACK).reshape(1, PH)

    # fused head-output weight: per-row block-diagonal (160,10) where rows of
    # head i only touch its output columns, then 4-way block-diag -> (640,40).
    wo_f = jnp.zeros((HID_TOTAL, TOTAL_OUT), jnp.float32)
    col = 0
    for i, rd in enumerate(GROUP_REG_DIMS):
        wo_f = wo_f.at[i * d:(i + 1) * d, col:col + rd].set(wo_list[i])
        col += rd
    bo_f = jnp.concatenate(bo_list, axis=-1)                           # (10,)
    wo_p = _block_diag(wo_f, PACK)                                     # (640,40)
    bo_p = jnp.tile(bo_f, PACK).reshape(1, PO)

    cdt = compute_dtype
    f32 = jnp.float32
    return (w1_p.astype(cdt), b1_p.astype(f32),
            w2_p.astype(cdt), b2_p.astype(f32),
            wh_p.astype(cdt), bh_p.astype(f32),
            wo_p.astype(cdt), bo_p.astype(f32))


def reg_layer_pallas(x, params, *, tile_n=4096, compute_dtype=jnp.bfloat16):
    """x: (..., EMBED_DIMS) float32 -> (..., TOTAL_OUT) float32."""
    lead_shape = x.shape[:-1]
    d = x.shape[-1]
    assert d == EMBED_DIMS, d
    x2 = x.reshape(-1, d)
    if x2.dtype != jnp.float32:
        x2 = x2.astype(jnp.float32)
    n = x2.shape[0]

    w1, b1, w2, b2, wh, bh, wo, bo = fuse_params(params, compute_dtype)

    # 4-row lane packing: (n,32) -> (n/4,128) is a free row-major relayout.
    # Pad rows only to a multiple of PACK (and a minimum of 8 packed sublanes),
    # never to the tile: the last grid block is allowed to be ragged and any
    # garbage rows read there only affect discarded output rows.
    n_pad = max(_round_up(n, PACK), PACK * 8)
    if n_pad != n:
        x2 = jnp.pad(x2, ((0, n_pad - n), (0, 0)))
    n4 = n_pad // PACK
    xp = x2.reshape(n4, PD)                              # (n4, 128)

    # Tile in packed rows: large tiles amortise the ~0.35us per-step overhead;
    # cap so big inputs still produce >=2 grid steps (v7x: 2 TensorCores share
    # the single "parallel" grid axis).
    tile = max(8, min(tile_n // PACK, _round_up(n4, 8)))
    tile = (tile // 8) * 8
    if n4 >= 16 and tile >= n4:
        tile = _round_up((n4 + 1) // 2, 8)
    grid = (pl.cdiv(n4, tile),)

    full = lambda shape: pl.BlockSpec(shape, lambda i: (0,) * len(shape))

    out = pl.pallas_call(
        _reg_layer_kernel,
        out_shape=jax.ShapeDtypeStruct((n4, PO), jnp.float32),
        grid_spec=pltpu.PrefetchScalarGridSpec(
            num_scalar_prefetch=0,
            grid=grid,
            in_specs=[
                pl.BlockSpec((tile, PD), lambda i: (i, 0)),   # packed x rows
                full((PD, PD)), full((1, PD)),                # W1 blkdiag, b1
                full((PD, PD)), full((1, PD)),                # W2 blkdiag, b2
                full((PD, PH)), full((1, PH)),                # head hidden W, b
                full((PH, PO)), full((1, PO)),                # head out W, b
            ],
            out_specs=pl.BlockSpec((tile, PO), lambda i: (i, 0)),
        ),
        compiler_params=pltpu.CompilerParams(
            dimension_semantics=("parallel",)),
    )(xp, w1, b1, w2, b2, wh, bh, wo, bo)

    out = out.reshape(n_pad, TOTAL_OUT)                  # free row-major unpack
    if n_pad != n:
        out = out[:n]
    return out.reshape(*lead_shape, TOTAL_OUT)


def init_params(key, d=EMBED_DIMS):
    """Deterministic synthetic parameters (shapes match RegLayer.__init__)."""
    ks = jax.random.split(key, 8)
    scale = 1.0 / jnp.sqrt(d)
    w1 = jax.random.normal(ks[0], (d, d), jnp.float32) * scale
    b1 = jax.random.normal(ks[1], (d,), jnp.float32) * 0.1
    w2 = jax.random.normal(ks[2], (d, d), jnp.float32) * scale
    b2 = jax.random.normal(ks[3], (d,), jnp.float32) * 0.1
    wh = jax.random.normal(ks[4], (N_HEADS, d, d), jnp.float32) * scale
    bh = jax.random.normal(ks[5], (N_HEADS, d), jnp.float32) * 0.1
    wkeys = jax.random.split(ks[6], N_HEADS)
    bkeys = jax.random.split(ks[7], N_HEADS)
    wo_list = [jax.random.normal(wkeys[i], (d, rd), jnp.float32) * scale
               for i, rd in enumerate(GROUP_REG_DIMS)]
    bo_list = [jax.random.normal(bkeys[i], (rd,), jnp.float32) * 0.1
               for i, rd in enumerate(GROUP_REG_DIMS)]
    return (w1, b1, w2, b2, wh, bh, wo_list, bo_list)


def reg_layer_ref(x, params):
    """Plain-JAX reference matching the PyTorch forward (per-head, unfused)."""
    w1, b1, w2, b2, wh, bh, wo_list, bo_list = params
    h = jnp.maximum(x @ w1 + b1, 0.0)
    reg_feat = jnp.maximum(h @ w2 + b2, 0.0)
    outs = []
    for i in range(N_HEADS):
        hh = jnp.maximum(reg_feat @ wh[i] + bh[i], 0.0)
        outs.append(hh @ wo_list[i] + bo_list[i])
    return jnp.concatenate(outs, axis=-1)


if __name__ == "__main__":
    key = jax.random.PRNGKey(0)
    pkey, xkey, xkey2 = jax.random.split(key, 3)
    params = init_params(pkey)

    # --- small shape consistent with the module: batch=2, seq=8, embed=32 ---
    batch, seq = 2, 8
    x = jax.random.normal(xkey, (batch, seq, EMBED_DIMS), jnp.float32)
    ref = reg_layer_ref(x, params)

    # exact f32 path (checks the fused / block-diagonal / packed math exactly)
    out_f32 = jax.block_until_ready(
        reg_layer_pallas(x, params, compute_dtype=jnp.float32))
    assert out_f32.shape == (batch, seq, TOTAL_OUT), out_f32.shape
    assert jnp.allclose(out_f32, ref, atol=1e-4, rtol=1e-4), \
        float(jnp.max(jnp.abs(out_f32 - ref)))

    # default: bf16 MXU operands, f32 accumulate / bias / ReLU
    out_bf16 = jax.block_until_ready(reg_layer_pallas(x, params))
    assert jnp.allclose(out_bf16, ref, atol=2e-1, rtol=5e-2), \
        float(jnp.max(jnp.abs(out_bf16 - ref)))

    # --- larger row count: multi-step grid, ragged last block, no pad copy ---
    batch2, seq2 = 3, 700                               # 2100 rows, 525 packed
    x_big = jax.random.normal(xkey2, (batch2, seq2, EMBED_DIMS), jnp.float32)
    ref_big = reg_layer_ref(x_big, params)
    out_big = jax.block_until_ready(reg_layer_pallas(x_big, params))
    assert out_big.shape == (batch2, seq2, TOTAL_OUT), out_big.shape
    assert jnp.allclose(out_big, ref_big, atol=2e-1, rtol=5e-2), \
        float(jnp.max(jnp.abs(out_big - ref_big)))

    print("KERNEL_OK")
</pallas_src>

<mosaic_0001>
module attributes {stable_mosaic.version = 11 : i64} {
  func.func @_reg_layer_kernel(%arg0: i32, %arg1: memref<8x128xf32, #tpu.memory_space<vmem>>, %arg2: memref<128x128xf32, #tpu.memory_space<vmem>>, %arg3: memref<1x128xf32, #tpu.memory_space<vmem>>, %arg4: memref<128x128xf32, #tpu.memory_space<vmem>>, %arg5: memref<1x128xf32, #tpu.memory_space<vmem>>, %arg6: memref<128x640xf32, #tpu.memory_space<vmem>>, %arg7: memref<1x640xf32, #tpu.memory_space<vmem>>, %arg8: memref<640x40xf32, #tpu.memory_space<vmem>>, %arg9: memref<1x40xf32, #tpu.memory_space<vmem>>, %arg10: memref<8x40xf32, #tpu.memory_space<vmem>>) attributes {dimension_semantics = [#tpu.dimension_semantics<parallel>], iteration_bounds = array<i64: 1>, scalar_prefetch = 0 : i64, scratch_operands = 0 : i64, tpu.core_type = #tpu.core_type<tc>, window_params = [{transform_indices = @transform_0, window_bounds = array<i64: 8, 128>}, {pipeline_mode = #tpu.pipeline_mode<synchronous>, transform_indices = @transform_1, window_bounds = array<i64: 128, 128>}, {pipeline_mode = #tpu.pipeline_mode<synchronous>, transform_indices = @transform_2, window_bounds = array<i64: 1, 128>}, {pipeline_mode = #tpu.pipeline_mode<synchronous>, transform_indices = @transform_3, window_bounds = array<i64: 128, 128>}, {pipeline_mode = #tpu.pipeline_mode<synchronous>, transform_indices = @transform_4, window_bounds = array<i64: 1, 128>}, {pipeline_mode = #tpu.pipeline_mode<synchronous>, transform_indices = @transform_5, window_bounds = array<i64: 128, 640>}, {pipeline_mode = #tpu.pipeline_mode<synchronous>, transform_indices = @transform_6, window_bounds = array<i64: 1, 640>}, {pipeline_mode = #tpu.pipeline_mode<synchronous>, transform_indices = @transform_7, window_bounds = array<i64: 640, 40>}, {pipeline_mode = #tpu.pipeline_mode<synchronous>, transform_indices = @transform_8, window_bounds = array<i64: 1, 40>}, {transform_indices = @transform_9, window_bounds = array<i64: 8, 40>}]} {
    %c0 = arith.constant 0 : index
    %c0_0 = arith.constant 0 : index
    %0 = vector.load %arg1[%c0, %c0_0] : memref<8x128xf32, #tpu.memory_space<vmem>>, vector<8x128xf32>
    %c0_1 = arith.constant 0 : index
    %c0_2 = arith.constant 0 : index
    %1 = vector.load %arg2[%c0_1, %c0_2] : memref<128x128xf32, #tpu.memory_space<vmem>>, vector<128x128xf32>
    %cst = arith.constant dense<0.000000e+00> : vector<8x128xf32>
    %2 = tpu.matmul %0, %1, %cst {dimension_numbers = #tpu.dot_dimension_numbers<[1], [0], [0], [1], [0, 0, 1, 1], [], []>} : vector<8x128xf32>, vector<128x128xf32>, vector<8x128xf32> -> vector<8x128xf32>
    %c0_3 = arith.constant 0 : index
    %c0_4 = arith.constant 0 : index
    %3 = vector.load %arg3[%c0_3, %c0_4] : memref<1x128xf32, #tpu.memory_space<vmem>>, vector<1x128xf32>
    %4 = vector.broadcast %3 : vector<1x128xf32> to vector<8x128xf32>
    %5 = arith.addf %2, %4 : vector<8x128xf32>
    %cst_5 = arith.constant 0.000000e+00 : f32
    %6 = vector.broadcast %cst_5 : f32 to vector<8x128xf32>
    %7 = arith.maximumf %5, %6 : vector<8x128xf32>
    %c0_6 = arith.constant 0 : index
    %c0_7 = arith.constant 0 : index
    %8 = vector.load %arg4[%c0_6, %c0_7] : memref<128x128xf32, #tpu.memory_space<vmem>>, vector<128x128xf32>
    %cst_8 = arith.constant dense<0.000000e+00> : vector<8x128xf32>
    %9 = tpu.matmul %7, %8, %cst_8 {dimension_numbers = #tpu.dot_dimension_numbers<[1], [0], [0], [1], [0, 0, 1, 1], [], []>} : vector<8x128xf32>, vector<128x128xf32>, vector<8x128xf32> -> vector<8x128xf32>
    %c0_9 = arith.constant 0 : index
    %c0_10 = arith.constant 0 : index
    %10 = vector.load %arg5[%c0_9, %c0_10] : memref<1x128xf32, #tpu.memory_space<vmem>>, vector<1x128xf32>
    %11 = vector.broadcast %10 : vector<1x128xf32> to vector<8x128xf32>
    %12 = arith.addf %9, %11 : vector<8x128xf32>
    %cst_11 = arith.constant 0.000000e+00 : f32
    %13 = vector.broadcast %cst_11 : f32 to vector<8x128xf32>
    %14 = arith.maximumf %12, %13 : vector<8x128xf32>
    %c0_12 = arith.constant 0 : index
    %c0_13 = arith.constant 0 : index
    %15 = vector.load %arg6[%c0_12, %c0_13] : memref<128x640xf32, #tpu.memory_space<vmem>>, vector<128x640xf32>
    %cst_14 = arith.constant dense<0.000000e+00> : vector<8x640xf32>
    %16 = tpu.matmul %14, %15, %cst_14 {dimension_numbers = #tpu.dot_dimension_numbers<[1], [0], [0], [1], [0, 0, 1, 1], [], []>} : vector<8x128xf32>, vector<128x640xf32>, vector<8x640xf32> -> vector<8x640xf32>
    %c0_15 = arith.constant 0 : index
    %c0_16 = arith.constant 0 : index
    %17 = vector.load %arg7[%c0_15, %c0_16] : memref<1x640xf32, #tpu.memory_space<vmem>>, vector<1x640xf32>
    %18 = vector.broadcast %17 : vector<1x640xf32> to vector<8x640xf32>
    %19 = arith.addf %16, %18 : vector<8x640xf32>
    %cst_17 = arith.constant 0.000000e+00 : f32
    %20 = vector.broadcast %cst_17 : f32 to vector<8x640xf32>
    %21 = arith.maximumf %19, %20 : vector<8x640xf32>
    %c0_18 = arith.constant 0 : index
    %c0_19 = arith.constant 0 : index
    %22 = vector.load %arg8[%c0_18, %c0_19] : memref<640x40xf32, #tpu.memory_space<vmem>>, vector<640x40xf32>
    %cst_20 = arith.constant dense<0.000000e+00> : vector<8x40xf32>
    %23 = tpu.matmul %21, %22, %cst_20 {dimension_numbers = #tpu.dot_dimension_numbers<[1], [0], [0], [1], [0, 0, 1, 1], [], []>} : vector<8x640xf32>, vector<640x40xf32>, vector<8x40xf32> -> vector<8x40xf32>
    %c0_21 = arith.constant 0 : index
    %c0_22 = arith.constant 0 : index
    %24 = vector.load %arg9[%c0_21, %c0_22] : memref<1x40xf32, #tpu.memory_space<vmem>>, vector<1x40xf32>
    %25 = vector.broadcast %24 : vector<1x40xf32> to vector<8x40xf32>
    %26 = arith.addf %23, %25 : vector<8x40xf32>
    %c0_23 = arith.constant 0 : index
    %c0_24 = arith.constant 0 : index
    %27 = vector.load %arg10[%c0_23, %c0_24] : memref<8x40xf32, #tpu.memory_space<vmem>>, vector<8x40xf32>
    tpu.vector_store %arg10[%c0_23, %c0_24], %26 {strides = array<i32>} : memref<8x40xf32, #tpu.memory_space<vmem>>, vector<8x40xf32>,
    return
  }
  func.func @transform_0(%arg0: i32) -> (i32, i32) {
    %c0_i32 = arith.constant 0 : i32
    %c0_i32_0 = arith.constant 0 : i32
    return %arg0, %c0_i32 : i32, i32
  }
  func.func @transform_1(%arg0: i32) -> (i32, i32) {
    %c0_i32 = arith.constant 0 : i32
    %c0_i32_0 = arith.constant 0 : i32
    %c0_i32_1 = arith.constant 0 : i32
    return %c0_i32, %c0_i32_0 : i32, i32
  }
  func.func @transform_2(%arg0: i32) -> (i32, i32) {
    %c0_i32 = arith.constant 0 : i32
    %c0_i32_0 = arith.constant 0 : i32
    %c0_i32_1 = arith.constant 0 : i32
    return %c0_i32, %c0_i32_0 : i32, i32
  }
  func.func @transform_3(%arg0: i32) -> (i32, i32) {
    %c0_i32 = arith.constant 0 : i32
    %c0_i32_0 = arith.constant 0 : i32
    %c0_i32_1 = arith.constant 0 : i32
    return %c0_i32, %c0_i32_0 : i32, i32
  }
  func.func @transform_4(%arg0: i32) -> (i32, i32) {
    %c0_i32 = arith.constant 0 : i32
    %c0_i32_0 = arith.constant 0 : i32
    %c0_i32_1 = arith.constant 0 : i32
    return %c0_i32, %c0_i32_0 : i32, i32
  }
  func.func @transform_5(%arg0: i32) -> (i32, i32) {
    %c0_i32 = arith.constant 0 : i32
    %c0_i32_0 = arith.constant 0 : i32
    %c0_i32_1 = arith.constant 0 : i32
    return %c0_i32, %c0_i32_0 : i32, i32
  }
  func.func @transform_6(%arg0: i32) -> (i32, i32) {
    %c0_i32 = arith.constant 0 : i32
    %c0_i32_0 = arith.constant 0 : i32
    %c0_i32_1 = arith.constant 0 : i32
    return %c0_i32, %c0_i32_0 : i32, i32
  }
  func.func @transform_7(%arg0: i32) -> (i32, i32) {
    %c0_i32 = arith.constant 0 : i32
    %c0_i32_0 = arith.constant 0 : i32
    %c0_i32_1 = arith.constant 0 : i32
    return %c0_i32, %c0_i32_0 : i32, i32
  }
  func.func @transform_8(%arg0: i32) -> (i32, i32) {
    %c0_i32 = arith.constant 0 : i32
    %c0_i32_0 = arith.constant 0 : i32
    %c0_i32_1 = arith.constant 0 : i32
    return %c0_i32, %c0_i32_0 : i32, i32
  }
  func.func @transform_9(%arg0: i32) -> (i32, i32) {
    %c0_i32 = arith.constant 0 : i32
    %c0_i32_0 = arith.constant 0 : i32
    return %arg0, %c0_i32 : i32, i32
  }
}

</mosaic_0001>

<llo_original>
// kernel: tpu_custom_call.1
$region0: #{tpu_custom_call.1}
  #allocation0 [shape = 'u32[]', space=smem, size = 0x4, offset = 0x4, fixed_abs, tag = 'smem constant byte address 0x4 - core index']
  #allocation1 [shape = 'u32[144,128]{1,0:T(1,128)}', space=vmem, size = 0x12000, scoped, tag = 'internal scratch']
  %s0 = inlined_call_operand.vmem [shape: f32[8,128], index: 0, kind: input, shape index: {}]
  %s1 = inlined_call_operand.vmem [shape: f32[128,128], index: 1, kind: input, shape index: {}]
  %s2 = inlined_call_operand.vmem [shape: f32[1,128], index: 2, kind: input, shape index: {}]
  %s3 = inlined_call_operand.hbm [shape: f32[128,128], index: 3, kind: input, shape index: {}]
  %s4 = inlined_call_operand.vmem [shape: f32[1,128], index: 4, kind: input, shape index: {}]
  %s5 = inlined_call_operand.vmem [shape: f32[128,640], index: 5, kind: input, shape index: {}]
  %s6 = inlined_call_operand.vmem [shape: f32[1,640], index: 6, kind: input, shape index: {}]
  %s7 = inlined_call_operand.vmem [shape: f32[640,40], index: 7, kind: input, shape index: {}]
  %s8 = inlined_call_operand.vmem [shape: f32[1,40], index: 8, kind: input, shape index: {}]
  %s9 = inlined_call_operand.hbm [shape: f32[8,40], index: 9, kind: output, shape index: {}]
  %s10 = sld [smem:[#allocation0]]
  $region50: #{tpu_custom_call.1} parent=0
    _
  %s12 = ssub.s32 1, %s10
  %s13 = scalar_select 0, %s12, %s10
  $region1: #{tpu_custom_call.1} parent=0
    #allocation2 [shape = 'u8[65536]{0}', space=vmem, size = 0x10000, scoped, tag = 'input window, operand 3, single buffered']
    #allocation3 [shape = 's32[1]{0}', space=sflag, size = 0x4, scoped, tag = 'scoped memory for tpu_custom_call.1']
    #allocation4 [shape = 's32[1]{0}', space=sflag, size = 0x4, scoped, tag = 'scoped memory for tpu_custom_call.1']
    #allocation5 [shape = 'u8[4096]{0}', space=vmem, size = 0x1000, scoped, tag = 'output window, operand 0, single buffered']
    %14 = vsyncpa [#allocation3], 0
    %15 = vsyncpa [#allocation4], 0
    // Predicated region
    $region2: #{tpu_custom_call.1} parent=1 // pred_check
      _
    $region3: #{tpu_custom_call.1} parent=1 // pred_check_branch
      %17 = sbr.rel (0) target = $region5
    $region4: #{tpu_custom_call.1} parent=1 // pred_region
      _
    $region5: #{tpu_custom_call.1} parent=1 // pred_fallthru
      _
    // Predicated region
    $region6: #{tpu_custom_call.1} parent=1 // pred_check
      _
    $region7: #{tpu_custom_call.1} parent=1 // pred_check_branch
      %19 = sbr.rel (0) target = $region9
    $region8: #{tpu_custom_call.1} parent=1 // pred_region
      _
    $region9: #{tpu_custom_call.1} parent=1 // pred_fallthru
      _
    // Predicated region
    $region10: #{tpu_custom_call.1} parent=1 // pred_check
      _
    $region11: #{tpu_custom_call.1} parent=1 // pred_check_branch
      %21 = sbr.rel (0) target = $region13
    $region12: #{tpu_custom_call.1} parent=1 // pred_region
      _
    $region13: #{tpu_custom_call.1} parent=1 // pred_fallthru
      _
    // Predicated region
    $region14: #{tpu_custom_call.1} parent=1 // pred_check
      _
    $region15: #{tpu_custom_call.1} parent=1 // pred_check_branch
      %23 = sbr.rel (0) target = $region17
    $region16: #{tpu_custom_call.1} parent=1 // pred_region
      %s25 = ssub.s32 2048, 2048
      %26 = vsyncadd [#allocation3], %s25
      %s27 = sshll.u32 [#allocation2], 4
      %s28 = int_to_ptr.vmem [resolvable:$true] %s27
      %33 = dma.hbm_to_vmem [thread:$0]  %s3, 2048, %s28, [#allocation3], 128, 128, 8
    $region17: #{tpu_custom_call.1} parent=1 // pred_fallthru
      _
    // Predicated region
    $region18: #{tpu_custom_call.1} parent=1 // pred_check
      _
    $region19: #{tpu_custom_call.1} parent=1 // pred_check_branch
      %35 = sbr.rel (0) target = $region21
    $region20: #{tpu_custom_call.1} parent=1 // pred_region
      _
    $region21: #{tpu_custom_call.1} parent=1 // pred_fallthru
      _
    // Predicated region
    $region22: #{tpu_custom_call.1} parent=1 // pred_check
      _
    $region23: #{tpu_custom_call.1} parent=1 // pred_check_branch
      %37 = sbr.rel (0) target = $region25
    $region24: #{tpu_custom_call.1} parent=1 // pred_region
      _
    $region25: #{tpu_custom_call.1} parent=1 // pred_fallthru
      _
    // Predicated region
    $region26: #{tpu_custom_call.1} parent=1 // pred_check
      _
    $region27: #{tpu_custom_call.1} parent=1 // pred_check_branch
      %39 = sbr.rel (0) target = $region29
    $region28: #{tpu_custom_call.1} parent=1 // pred_region
      _
    $region29: #{tpu_custom_call.1} parent=1 // pred_fallthru
      _
    // Predicated region
    $region30: #{tpu_custom_call.1} parent=1 // pred_check
      _
    $region31: #{tpu_custom_call.1} parent=1 // pred_check_branch
      %41 = sbr.rel (0) target = $region33
    $region32: #{tpu_custom_call.1} parent=1 // pred_region
      _
    $region33: #{tpu_custom_call.1} parent=1 // pred_fallthru
      _
    // Predicated region
    $region34: #{tpu_custom_call.1} parent=1 // pred_check
      _
    $region35: #{tpu_custom_call.1} parent=1 // pred_check_branch
      %43 = sbr.rel (0) target = $region37
    $region36: #{tpu_custom_call.1} parent=1 // pred_region
      _
    $region37: #{tpu_custom_call.1} parent=1 // pred_fallthru
      _
    // Predicated region
    $region38: #{tpu_custom_call.1} parent=1 // pred_check
      _
    $region39: #{tpu_custom_call.1} parent=1 // pred_check_branch
      %45 = sbr.rel (0) target = $region41
    $region40: #{tpu_custom_call.1} parent=1 // pred_region
      %46 = dma.done [#allocation3], 2048
    $region41: #{tpu_custom_call.1} parent=1 // pred_fallthru
      _
    %v47 = vld [vmem:[%s0] sm:$0xff]
    %v48 = vld [vmem:[%s1] sm:$0xff]
    %v49 = vld [vmem:[%s1 + $0x8] sm:$0xff]
    %v50 = vld [vmem:[%s1 + $0x10] sm:$0xff]
    %v51 = vld [vmem:[%s1 + $0x18] sm:$0xff]
    %v52 = vld [vmem:[%s1 + $0x20] sm:$0xff]
    %v53 = vld [vmem:[%s1 + $0x28] sm:$0xff]
    %v54 = vld [vmem:[%s1 + $0x30] sm:$0xff]
    %v55 = vld [vmem:[%s1 + $0x38] sm:$0xff]
    %v56 = vld [vmem:[%s1 + $0x40] sm:$0xff]
    %v57 = vld [vmem:[%s1 + $0x48] sm:$0xff]
    %v58 = vld [vmem:[%s1 + $0x50] sm:$0xff]
    %v59 = vld [vmem:[%s1 + $0x58] sm:$0xff]
    %v60 = vld [vmem:[%s1 + $0x60] sm:$0xff]
    %v61 = vld [vmem:[%s1 + $0x68] sm:$0xff]
    %v62 = vld [vmem:[%s1 + $0x70] sm:$0xff]
    %v63 = vld [vmem:[%s1 + $0x78] sm:$0xff]
    %v64 = vld [vmem:[%s2] sm:$0x1]
    %v66 = vlaneseq
    %v67 = vshrl.u32 %v66, 7
    %v68 = vsub.s32 0, %v67
    %v69 = vrot.slane %v64, %v68
    %71 = vmatprep.subr.mxu0 0.0
    %72 = vmatpush1.msra.mxu0 %v48
    %73 = vmatprep.subr.mxu0 0.0
    %74 = vmatpush1.msra.mxu0 %v49
    %75 = vmatprep.subr.mxu0 0.0
    %76 = vmatpush1.msra.mxu0 %v50
    %77 = vmatprep.subr.mxu0 0.0
    %78 = vmatpush1.msra.mxu0 %v51
    %79 = vmatprep.subr.mxu0 0.0
    %80 = vmatpush1.msra.mxu0 %v52
    %81 = vmatprep.subr.mxu0 0.0
    %82 = vmatpush1.msra.mxu0 %v53
    %83 = vmatprep.subr.mxu0 0.0
    %84 = vmatpush1.msra.mxu0 %v54
    %85 = vmatprep.subr.mxu0 0.0
    %86 = vmatpush1.msra.mxu0 %v55
    %87 = vmatprep.subr.mxu0 0.0
    %88 = vmatpush1.msra.mxu0 %v56
    %89 = vmatprep.subr.mxu0 0.0
    %90 = vmatpush1.msra.mxu0 %v57
    %91 = vmatprep.subr.mxu0 0.0
    %92 = vmatpush1.msra.mxu0 %v58
    %93 = vmatprep.subr.mxu0 0.0
    %94 = vmatpush1.msra.mxu0 %v59
    %95 = vmatprep.subr.mxu0 0.0
    %96 = vmatpush1.msra.mxu0 %v60
    %97 = vmatprep.subr.mxu0 0.0
    %98 = vmatpush1.msra.mxu0 %v61
    %99 = vmatprep.subr.mxu0 0.0
    %100 = vmatpush1.msra.mxu0 %v62
    %101 = vmatprep.subr.mxu0 0.0
    %102 = vmatpush1.msra.mxu0 %v63
    %103 = vmatprep.subr.mxu0 0.0
    %104 = vmatpush1.msra.mxu0 0.0
    %105 = vmatprep.subr.mxu0 0.0
    %106 = vmatpush1.msra.mxu0 0.0
    %107 = vmatprep.subr.mxu0 0.0
    %108 = vmatpush1.msra.mxu0 0.0
    %109 = vmatprep.subr.mxu0 0.0
    %110 = vmatpush1.msra.mxu0 0.0
    %111 = vmatprep.subr.mxu0 0.0
    %112 = vmatpush1.msra.mxu0 0.0
    %113 = vmatprep.subr.mxu0 0.0
    %114 = vmatpush1.msra.mxu0 0.0
    %115 = vmatprep.subr.mxu0 0.0
    %116 = vmatpush1.msra.mxu0 0.0
    %117 = vmatprep.subr.mxu0 0.0
    %118 = vmatpush1.msra.mxu0 0.0
    %119 = vmatprep.subr.mxu0 0.0
    %120 = vmatpush1.msra.mxu0 0.0
    %121 = vmatprep.subr.mxu0 0.0
    %122 = vmatpush1.msra.mxu0 0.0
    %123 = vmatprep.subr.mxu0 0.0
    %124 = vmatpush1.msra.mxu0 0.0
    %125 = vmatprep.subr.mxu0 0.0
    %126 = vmatpush1.msra.mxu0 0.0
    %127 = vmatprep.subr.mxu0 0.0
    %128 = vmatpush1.msra.mxu0 0.0
    %129 = vmatprep.subr.mxu0 0.0
    %130 = vmatpush1.msra.mxu0 0.0
    %131 = vmatprep.subr.mxu0 0.0
    %132 = vmatpush1.msra.mxu0 0.0
    %133 = vmatprep.subr.mxu0 0.0
    %134 = vmatpush1.msra.mxu0 0.0
    %135 = vmatprep.mubr.f32.mxu0 0.0
    %136 = vmatmul.mubr.f32.gmra.mrb[0].mxu0 %v47
    %v137 = vpop.f32.mrb[0].mxu0
    %v138 = vadd.f32 %v69, %v137
    %v139 = vpop.f32.mrb[0].mxu0
    %140 = vdwg.mxu0
    %v141 = vmax.f32 %v138, 0.0
    %v142 = vld [vmem:[#allocation2] sm:$0xff]
    %v143 = vld [vmem:[#allocation2 + $0x8] sm:$0xff]
    %v144 = vld [vmem:[#allocation2 + $0x10] sm:$0xff]
    %v145 = vld [vmem:[#allocation2 + $0x18] sm:$0xff]
    %v146 = vld [vmem:[#allocation2 + $0x20] sm:$0xff]
    %v147 = vld [vmem:[#allocation2 + $0x28] sm:$0xff]
    %v148 = vld [vmem:[#allocation2 + $0x30] sm:$0xff]
    %v149 = vld [vmem:[#allocation2 + $0x38] sm:$0xff]
    %v150 = vld [vmem:[#allocation2 + $0x40] sm:$0xff]
    %v151 = vld [vmem:[#allocation2 + $0x48] sm:$0xff]
    %v152 = vld [vmem:[#allocation2 + $0x50] sm:$0xff]
    %v153 = vld [vmem:[#allocation2 + $0x58] sm:$0xff]
    %v154 = vld [vmem:[#allocation2 + $0x60] sm:$0xff]
    %v155 = vld [vmem:[#allocation2 + $0x68] sm:$0xff]
    %v156 = vld [vmem:[#allocation2 + $0x70] sm:$0xff]
    %v157 = vld [vmem:[#allocation2 + $0x78] sm:$0xff]
    %v158 = vld [vmem:[%s4] sm:$0x1]
    %v160 = vlaneseq
    %v161 = vshrl.u32 %v160, 7
    %v162 = vsub.s32 0, %v161
    %v163 = vrot.slane %v158, %v162
    %165 = vmatprep.subr.mxu0 0.0
    %166 = vmatpush1.msra.mxu0 %v142
    %167 = vmatprep.subr.mxu0 0.0
    %168 = vmatpush1.msra.mxu0 %v143
    %169 = vmatprep.subr.mxu0 0.0
    %170 = vmatpush1.msra.mxu0 %v144
    %171 = vmatprep.subr.mxu0 0.0
    %172 = vmatpush1.msra.mxu0 %v145
    %173 = vmatprep.subr.mxu0 0.0
    %174 = vmatpush1.msra.mxu0 %v146
    %175 = vmatprep.subr.mxu0 0.0
    %176 = vmatpush1.msra.mxu0 %v147
    %177 = vmatprep.subr.mxu0 0.0
    %178 = vmatpush1.msra.mxu0 %v148
    %179 = vmatprep.subr.mxu0 0.0
    %180 = vmatpush1.msra.mxu0 %v149
    %181 = vmatprep.subr.mxu0 0.0
    %182 = vmatpush1.msra.mxu0 %v150
    %183 = vmatprep.subr.mxu0 0.0
    %184 = vmatpush1.msra.mxu0 %v151
    %185 = vmatprep.subr.mxu0 0.0
    %186 = vmatpush1.msra.mxu0 %v152
    %187 = vmatprep.subr.mxu0 0.0
    %188 = vmatpush1.msra.mxu0 %v153
    %189 = vmatprep.subr.mxu0 0.0
    %190 = vmatpush1.msra.mxu0 %v154
    %191 = vmatprep.subr.mxu0 0.0
    %192 = vmatpush1.msra.mxu0 %v155
    %193 = vmatprep.subr.mxu0 0.0
    %194 = vmatpush1.msra.mxu0 %v156
    %195 = vmatprep.subr.mxu0 0.0
    %196 = vmatpush1.msra.mxu0 %v157
    %197 = vmatprep.subr.mxu0 0.0
    %198 = vmatpush1.msra.mxu0 0.0
    %199 = vmatprep.subr.mxu0 0.0
    %200 = vmatpush1.msra.mxu0 0.0
    %201 = vmatprep.subr.mxu0 0.0
    %202 = vmatpush1.msra.mxu0 0.0
    %203 = vmatprep.subr.mxu0 0.0
    %204 = vmatpush1.msra.mxu0 0.0
    %205 = vmatprep.subr.mxu0 0.0
    %206 = vmatpush1.msra.mxu0 0.0
    %207 = vmatprep.subr.mxu0 0.0
    %208 = vmatpush1.msra.mxu0 0.0
    %209 = vmatprep.subr.mxu0 0.0
    %210 = vmatpush1.msra.mxu0 0.0
    %211 = vmatprep.subr.mxu0 0.0
    %212 = vmatpush1.msra.mxu0 0.0
    %213 = vmatprep.subr.mxu0 0.0
    %214 = vmatpush1.msra.mxu0 0.0
    %215 = vmatprep.subr.mxu0 0.0
    %216 = vmatpush1.msra.mxu0 0.0
    %217 = vmatprep.subr.mxu0 0.0
    %218 = vmatpush1.msra.mxu0 0.0
    %219 = vmatprep.subr.mxu0 0.0
    %220 = vmatpush1.msra.mxu0 0.0
    %221 = vmatprep.subr.mxu0 0.0
    %222 = vmatpush1.msra.mxu0 0.0
    %223 = vmatprep.subr.mxu0 0.0
    %224 = vmatpush1.msra.mxu0 0.0
    %225 = vmatprep.subr.mxu0 0.0
    %226 = vmatpush1.msra.mxu0 0.0
    %227 = vmatprep.subr.mxu0 0.0
    %228 = vmatpush1.msra.mxu0 0.0
    %229 = vmatprep.mubr.f32.mxu0 0.0
    %230 = vmatmul.mubr.f32.gmra.mrb[0].mxu0 %v141
    %v231 = vpop.f32.mrb[0].mxu0
    %v232 = vadd.f32 %v163, %v231
    %v233 = vpop.f32.mrb[0].mxu0
    %234 = vdwg.mxu0
    %v235 = vmax.f32 %v232, 0.0
    %v236 = vld [vmem:[%s5] sm:$0xff]
    %v237 = vld [vmem:[%s5 + $0x8] sm:$0xff]
    %v238 = vld [vmem:[%s5 + $0x10] sm:$0xff]
    %v239 = vld [vmem:[%s5 + $0x18] sm:$0xff]
    %v240 = vld [vmem:[%s5 + $0x20] sm:$0xff]
    %v241 = vld [vmem:[%s5 + $0x28] sm:$0xff]
    %v242 = vld [vmem:[%s5 + $0x30] sm:$0xff]
    %v243 = vld [vmem:[%s5 + $0x38] sm:$0xff]
    %v244 = vld [vmem:[%s5 + $0x40] sm:$0xff]
    %v245 = vld [vmem:[%s5 + $0x48] sm:$0xff]
    %v246 = vld [vmem:[%s5 + $0x50] sm:$0xff]
    %v247 = vld [vmem:[%s5 + $0x58] sm:$0xff]
    %v248 = vld [vmem:[%s5 + $0x60] sm:$0xff]
    %v249 = vld [vmem:[%s5 + $0x68] sm:$0xff]
    %v250 = vld [vmem:[%s5 + $0x70] sm:$0xff]
    %v251 = vld [vmem:[%s5 + $0x78] sm:$0xff]
    %v252 = vld [vmem:[%s5 + $0x80] sm:$0xff]
    %v253 = vld [vmem:[%s5 + $0x88] sm:$0xff]
    %v254 = vld [vmem:[%s5 + $0x90] sm:$0xff]
    %v255 = vld [vmem:[%s5 + $0x98] sm:$0xff]
    %v256 = vld [vmem:[%s5 + $0xa0] sm:$0xff]
    %v257 = vld [vmem:[%s5 + $0xa8] sm:$0xff]
    %v258 = vld [vmem:[%s5 + $0xb0] sm:$0xff]
    %v259 = vld [vmem:[%s5 + $0xb8] sm:$0xff]
    %v260 = vld [vmem:[%s5 + $0xc0] sm:$0xff]
    %v261 = vld [vmem:[%s5 + $0xc8] sm:$0xff]
    %v262 = vld [vmem:[%s5 + $0xd0] sm:$0xff]
    %v263 = vld [vmem:[%s5 + $0xd8] sm:$0xff]
    %v264 = vld [vmem:[%s5 + $0xe0] sm:$0xff]
    %v265 = vld [vmem:[%s5 + $0xe8] sm:$0xff]
    %v266 = vld [vmem:[%s5 + $0xf0] sm:$0xff]
    %v267 = vld [vmem:[%s5 + $0xf8] sm:$0xff]
    %v268 = vld [vmem:[%s5 + $0x100] sm:$0xff]
    %v269 = vld [vmem:[%s5 + $0x108] sm:$0xff]
    %v270 = vld [vmem:[%s5 + $0x110] sm:$0xff]
    %v271 = vld [vmem:[%s5 + $0x118] sm:$0xff]
    %v272 = vld [vmem:[%s5 + $0x120] sm:$0xff]
    %v273 = vld [vmem:[%s5 + $0x128] sm:$0xff]
    %v274 = vld [vmem:[%s5 + $0x130] sm:$0xff]
    %v275 = vld [vmem:[%s5 + $0x138] sm:$0xff]
    %v276 = vld [vmem:[%s5 + $0x140] sm:$0xff]
    %v277 = vld [vmem:[%s5 + $0x148] sm:$0xff]
    %v278 = vld [vmem:[%s5 + $0x150] sm:$0xff]
    %v279 = vld [vmem:[%s5 + $0x158] sm:$0xff]
    %v280 = vld [vmem:[%s5 + $0x160] sm:$0xff]
    %v281 = vld [vmem:[%s5 + $0x168] sm:$0xff]
    %v282 = vld [vmem:[%s5 + $0x170] sm:$0xff]
    %v283 = vld [vmem:[%s5 + $0x178] sm:$0xff]
    %v284 = vld [vmem:[%s5 + $0x180] sm:$0xff]
    %v285 = vld [vmem:[%s5 + $0x188] sm:$0xff]
    %v286 = vld [vmem:[%s5 + $0x190] sm:$0xff]
    %v287 = vld [vmem:[%s5 + $0x198] sm:$0xff]
    %v288 = vld [vmem:[%s5 + $0x1a0] sm:$0xff]
    %v289 = vld [vmem:[%s5 + $0x1a8] sm:$0xff]
    %v290 = vld [vmem:[%s5 + $0x1b0] sm:$0xff]
    %v291 = vld [vmem:[%s5 + $0x1b8] sm:$0xff]
    %v292 = vld [vmem:[%s5 + $0x1c0] sm:$0xff]
    %v293 = vld [vmem:[%s5 + $0x1c8] sm:$0xff]
    %v294 = vld [vmem:[%s5 + $0x1d0] sm:$0xff]
    %v295 = vld [vmem:[%s5 + $0x1d8] sm:$0xff]
    %v296 = vld [vmem:[%s5 + $0x1e0] sm:$0xff]
    %v297 = vld [vmem:[%s5 + $0x1e8] sm:$0xff]
    %v298 = vld [vmem:[%s5 + $0x1f0] sm:$0xff]
    %v299 = vld [vmem:[%s5 + $0x1f8] sm:$0xff]
    %v300 = vld [vmem:[%s5 + $0x200] sm:$0xff]
    %v301 = vld [vmem:[%s5 + $0x208] sm:$0xff]
    %v302 = vld [vmem:[%s5 + $0x210] sm:$0xff]
    %v303 = vld [vmem:[%s5 + $0x218] sm:$0xff]
    %v304 = vld [vmem:[%s5 + $0x220] sm:$0xff]
    %v305 = vld [vmem:[%s5 + $0x228] sm:$0xff]
    %v306 = vld [vmem:[%s5 + $0x230] sm:$0xff]
    %v307 = vld [vmem:[%s5 + $0x238] sm:$0xff]
    %v308 = vld [vmem:[%s5 + $0x240] sm:$0xff]
    %v309 = vld [vmem:[%s5 + $0x248] sm:$0xff]
    %v310 = vld [vmem:[%s5 + $0x250] sm:$0xff]
    %v311 = vld [vmem:[%s5 + $0x258] sm:$0xff]
    %v312 = vld [vmem:[%s5 + $0x260] sm:$0xff]
    %v313 = vld [vmem:[%s5 + $0x268] sm:$0xff]
    %v314 = vld [vmem:[%s5 + $0x270] sm:$0xff]
    %v315 = vld [vmem:[%s5 + $0x278] sm:$0xff]
    %v316 = vld [vmem:[%s6] sm:$0x1f]
    %v318 = vlaneseq
    %v319 = vshrl.u32 %v318, 7
    %v320 = vsub.s32 0, %v319
    %v321 = vrot.slane %v316, %v320
    %v322 = vlaneseq
    %v323 = vshrl.u32 %v322, 7
    %v324 = vsub.s32 1, %v323
    %v325 = vrot.slane %v316, %v324
    %v326 = vlaneseq
    %v327 = vshrl.u32 %v326, 7
    %v328 = vsub.s32 2, %v327
    %v329 = vrot.slane %v316, %v328
    %v330 = vlaneseq
    %v331 = vshrl.u32 %v330, 7
    %v332 = vsub.s32 3, %v331
    %v333 = vrot.slane %v316, %v332
    %v334 = vlaneseq
    %v335 = vshrl.u32 %v334, 7
    %v336 = vsub.s32 4, %v335
    %v337 = vrot.slane %v316, %v336
    %343 = vmatprep.subr.mxu0 %v237
    %344 = vmatpush1.msra.mxu0 %v236
    %345 = vmatprep.subr.mxu0 %v242
    %346 = vmatpush1.msra.mxu0 %v241
    %347 = vmatprep.subr.mxu0 %v247
    %348 = vmatpush1.msra.mxu0 %v246
    %349 = vmatprep.subr.mxu0 %v252
    %350 = vmatpush1.msra.mxu0 %v251
    %351 = vmatprep.subr.mxu0 %v257
    %352 = vmatpush1.msra.mxu0 %v256
    %353 = vmatprep.subr.mxu0 %v262
    %354 = vmatpush1.msra.mxu0 %v261
    %355 = vmatprep.subr.mxu0 %v267
    %356 = vmatpush1.msra.mxu0 %v266
    %357 = vmatprep.subr.mxu0 %v272
    %358 = vmatpush1.msra.mxu0 %v271
    %359 = vmatprep.subr.mxu0 %v277
    %360 = vmatpush1.msra.mxu0 %v276
    %361 = vmatprep.subr.mxu0 %v282
    %362 = vmatpush1.msra.mxu0 %v281
    %363 = vmatprep.subr.mxu0 %v287
    %364 = vmatpush1.msra.mxu0 %v286
    %365 = vmatprep.subr.mxu0 %v292
    %366 = vmatpush1.msra.mxu0 %v291
    %367 = vmatprep.subr.mxu0 %v297
    %368 = vmatpush1.msra.mxu0 %v296
    %369 = vmatprep.subr.mxu0 %v302
    %370 = vmatpush1.msra.mxu0 %v301
    %371 = vmatprep.subr.mxu0 %v307
    %372 = vmatpush1.msra.mxu0 %v306
    %373 = vmatprep.subr.mxu0 %v312
    %374 = vmatpush1.msra.mxu0 %v311
    %375 = vmatprep.subr.mxu0 0.0
    %376 = vmatpush1.msra.mxu0 0.0
    %377 = vmatprep.subr.mxu0 0.0
    %378 = vmatpush1.msra.mxu0 0.0
    %379 = vmatprep.subr.mxu0 0.0
    %380 = vmatpush1.msra.mxu0 0.0
    %381 = vmatprep.subr.mxu0 0.0
    %382 = vmatpush1.msra.mxu0 0.0
    %383 = vmatprep.subr.mxu0 0.0
    %384 = vmatpush1.msra.mxu0 0.0
    %385 = vmatprep.subr.mxu0 0.0
    %386 = vmatpush1.msra.mxu0 0.0
    %387 = vmatprep.subr.mxu0 0.0
    %388 = vmatpush1.msra.mxu0 0.0
    %389 = vmatprep.subr.mxu0 0.0
    %390 = vmatpush1.msra.mxu0 0.0
    %391 = vmatprep.subr.mxu0 0.0
    %392 = vmatpush1.msra.mxu0 0.0
    %393 = vmatprep.subr.mxu0 0.0
    %394 = vmatpush1.msra.mxu0 0.0
    %395 = vmatprep.subr.mxu0 0.0
    %396 = vmatpush1.msra.mxu0 0.0
    %397 = vmatprep.subr.mxu0 0.0
    %398 = vmatpush1.msra.mxu0 0.0
    %399 = vmatprep.subr.mxu0 0.0
    %400 = vmatpush1.msra.mxu0 0.0
    %401 = vmatprep.subr.mxu0 0.0
    %402 = vmatpush1.msra.mxu0 0.0
    %403 = vmatprep.subr.mxu0 0.0
    %404 = vmatpush1.msra.mxu0 0.0
    %405 = vmatprep.subr.mxu0 0.0
    %406 = vmatpush1.msra.mxu0 0.0
    %407 = vmatprep.mubr.f32.mxu0 0.0
    %408 = vmatmul.mubr.f32.gmra.mrb[0].mxu0 %v235
    %v409 = vpop.f32.mrb[0].mxu0
    %v410 = vadd.f32 %v321, %v409
    %v411 = vpop.f32.mrb[0].mxu0
    %v412 = vadd.f32 %v325, %v411
    %413 = vdwg.mxu0
    %414 = vmatprep.subr.mxu0 %v239
    %415 = vmatpush1.msra.mxu0 %v238
    %416 = vmatprep.subr.mxu0 %v244
    %417 = vmatpush1.msra.mxu0 %v243
    %418 = vmatprep.subr.mxu0 %v249
    %419 = vmatpush1.msra.mxu0 %v248
    %420 = vmatprep.subr.mxu0 %v254
    %421 = vmatpush1.msra.mxu0 %v253
    %422 = vmatprep.subr.mxu0 %v259
    %423 = vmatpush1.msra.mxu0 %v258
    %424 = vmatprep.subr.mxu0 %v264
    %425 = vmatpush1.msra.mxu0 %v263
    %426 = vmatprep.subr.mxu0 %v269
    %427 = vmatpush1.msra.mxu0 %v268
    %428 = vmatprep.subr.mxu0 %v274
    %429 = vmatpush1.msra.mxu0 %v273
    %430 = vmatprep.subr.mxu0 %v279
    %431 = vmatpush1.msra.mxu0 %v278
    %432 = vmatprep.subr.mxu0 %v284
    %433 = vmatpush1.msra.mxu0 %v283
    %434 = vmatprep.subr.mxu0 %v289
    %435 = vmatpush1.msra.mxu0 %v288
    %436 = vmatprep.subr.mxu0 %v294
    %437 = vmatpush1.msra.mxu0 %v293
    %438 = vmatprep.subr.mxu0 %v299
    %439 = vmatpush1.msra.mxu0 %v298
    %440 = vmatprep.subr.mxu0 %v304
    %441 = vmatpush1.msra.mxu0 %v303
    %442 = vmatprep.subr.mxu0 %v309
    %443 = vmatpush1.msra.mxu0 %v308
    %444 = vmatprep.subr.mxu0 %v314
    %445 = vmatpush1.msra.mxu0 %v313
    %446 = vmatprep.subr.mxu0 0.0
    %447 = vmatpush1.msra.mxu0 0.0
    %448 = vmatprep.subr.mxu0 0.0
    %449 = vmatpush1.msra.mxu0 0.0
    %450 = vmatprep.subr.mxu0 0.0
    %451 = vmatpush1.msra.mxu0 0.0
    %452 = vmatprep.subr.mxu0 0.0
    %453 = vmatpush1.msra.mxu0 0.0
    %454 = vmatprep.subr.mxu0 0.0
    %455 = vmatpush1.msra.mxu0 0.0
    %456 = vmatprep.subr.mxu0 0.0
    %457 = vmatpush1.msra.mxu0 0.0
    %458 = vmatprep.subr.mxu0 0.0
    %459 = vmatpush1.msra.mxu0 0.0
    %460 = vmatprep.subr.mxu0 0.0
    %461 = vmatpush1.msra.mxu0 0.0
    %462 = vmatprep.subr.mxu0 0.0
    %463 = vmatpush1.msra.mxu0 0.0
    %464 = vmatprep.subr.mxu0 0.0
    %465 = vmatpush1.msra.mxu0 0.0
    %466 = vmatprep.subr.mxu0 0.0
    %467 = vmatpush1.msra.mxu0 0.0
    %468 = vmatprep.subr.mxu0 0.0
    %469 = vmatpush1.msra.mxu0 0.0
    %470 = vmatprep.subr.mxu0 0.0
    %471 = vmatpush1.msra.mxu0 0.0
    %472 = vmatprep.subr.mxu0 0.0
    %473 = vmatpush1.msra.mxu0 0.0
    %474 = vmatprep.subr.mxu0 0.0
    %475 = vmatpush1.msra.mxu0 0.0
    %476 = vmatprep.subr.mxu0 0.0
    %477 = vmatpush1.msra.mxu0 0.0
    %478 = vmatprep.mubr.f32.mxu0 0.0
    %479 = vmatmul.mubr.f32.gmra.mrb[0].mxu0 %v235
    %v480 = vpop.f32.mrb[0].mxu0
    %v481 = vadd.f32 %v329, %v480
    %v482 = vpop.f32.mrb[0].mxu0
    %v483 = vadd.f32 %v333, %v482
    %484 = vdwg.mxu0
    %485 = vmatprep.subr.mxu0 0.0
    %486 = vmatpush1.msra.mxu0 %v240
    %487 = vmatprep.subr.mxu0 0.0
    %488 = vmatpush1.msra.mxu0 %v245
    %489 = vmatprep.subr.mxu0 0.0
    %490 = vmatpush1.msra.mxu0 %v250
    %491 = vmatprep.subr.mxu0 0.0
    %492 = vmatpush1.msra.mxu0 %v255
    %493 = vmatprep.subr.mxu0 0.0
    %494 = vmatpush1.msra.mxu0 %v260
    %495 = vmatprep.subr.mxu0 0.0
    %496 = vmatpush1.msra.mxu0 %v265
    %497 = vmatprep.subr.mxu0 0.0
    %498 = vmatpush1.msra.mxu0 %v270
    %499 = vmatprep.subr.mxu0 0.0
    %500 = vmatpush1.msra.mxu0 %v275
    %501 = vmatprep.subr.mxu0 0.0
    %502 = vmatpush1.msra.mxu0 %v280
    %503 = vmatprep.subr.mxu0 0.0
    %504 = vmatpush1.msra.mxu0 %v285
    %505 = vmatprep.subr.mxu0 0.0
    %506 = vmatpush1.msra.mxu0 %v290
    %507 = vmatprep.subr.mxu0 0.0
    %508 = vmatpush1.msra.mxu0 %v295
    %509 = vmatprep.subr.mxu0 0.0
    %510 = vmatpush1.msra.mxu0 %v300
    %511 = vmatprep.subr.mxu0 0.0
    %512 = vmatpush1.msra.mxu0 %v305
    %513 = vmatprep.subr.mxu0 0.0
    %514 = vmatpush1.msra.mxu0 %v310
    %515 = vmatprep.subr.mxu0 0.0
    %516 = vmatpush1.msra.mxu0 %v315
    %517 = vmatprep.subr.mxu0 0.0
    %518 = vmatpush1.msra.mxu0 0.0
    %519 = vmatprep.subr.mxu0 0.0
    %520 = vmatpush1.msra.mxu0 0.0
    %521 = vmatprep.subr.mxu0 0.0
    %522 = vmatpush1.msra.mxu0 0.0
    %523 = vmatprep.subr.mxu0 0.0
    %524 = vmatpush1.msra.mxu0 0.0
    %525 = vmatprep.subr.mxu0 0.0
    %526 = vmatpush1.msra.mxu0 0.0
    %527 = vmatprep.subr.mxu0 0.0
    %528 = vmatpush1.msra.mxu0 0.0
    %529 = vmatprep.subr.mxu0 0.0
    %530 = vmatpush1.msra.mxu0 0.0
    %531 = vmatprep.subr.mxu0 0.0
    %532 = vmatpush1.msra.mxu0 0.0
    %533 = vmatprep.subr.mxu0 0.0
    %534 = vmatpush1.msra.mxu0 0.0
    %535 = vmatprep.subr.mxu0 0.0
    %536 = vmatpush1.msra.mxu0 0.0
    %537 = vmatprep.subr.mxu0 0.0
    %538 = vmatpush1.msra.mxu0 0.0
    %539 = vmatprep.subr.mxu0 0.0
    %540 = vmatpush1.msra.mxu0 0.0
    %541 = vmatprep.subr.mxu0 0.0
    %542 = vmatpush1.msra.mxu0 0.0
    %543 = vmatprep.subr.mxu0 0.0
    %544 = vmatpush1.msra.mxu0 0.0
    %545 = vmatprep.subr.mxu0 0.0
    %546 = vmatpush1.msra.mxu0 0.0
    %547 = vmatprep.subr.mxu0 0.0
    %548 = vmatpush1.msra.mxu0 0.0
    %549 = vmatprep.mubr.f32.mxu0 0.0
    %550 = vmatmul.mubr.f32.gmra.mrb[0].mxu0 %v235
    %v551 = vpop.f32.mrb[0].mxu0
    %v552 = vadd.f32 %v337, %v551
    %v553 = vpop.f32.mrb[0].mxu0
    %554 = vdwg.mxu0
    %v555 = vmax.f32 %v410, 0.0
    %v556 = vmax.f32 %v412, 0.0
    %v557 = vmax.f32 %v481, 0.0
    %v558 = vmax.f32 %v483, 0.0
    %v559 = vmax.f32 %v552, 0.0
    %v560 = vld [vmem:[%s7] sm:$0xff]
    %v561 = vld [vmem:[%s7 + $0x8] sm:$0xff]
    %v562 = vld [vmem:[%s7 + $0x10] sm:$0xff]
    %v563 = vld [vmem:[%s7 + $0x18] sm:$0xff]
    %v564 = vld [vmem:[%s7 + $0x20] sm:$0xff]
    %v565 = vld [vmem:[%s7 + $0x28] sm:$0xff]
    %v566 = vld [vmem:[%s7 + $0x30] sm:$0xff]
    %v567 = vld [vmem:[%s7 + $0x38] sm:$0xff]
    %v568 = vld [vmem:[%s7 + $0x40] sm:$0xff]
    %v569 = vld [vmem:[%s7 + $0x48] sm:$0xff]
    %v570 = vld [vmem:[%s7 + $0x50] sm:$0xff]
    %v571 = vld [vmem:[%s7 + $0x58] sm:$0xff]
    %v572 = vld [vmem:[%s7 + $0x60] sm:$0xff]
    %v573 = vld [vmem:[%s7 + $0x68] sm:$0xff]
    %v574 = vld [vmem:[%s7 + $0x70] sm:$0xff]
    %v575 = vld [vmem:[%s7 + $0x78] sm:$0xff]
    %v576 = vld [vmem:[%s7 + $0x80] sm:$0xff]
    %v577 = vld [vmem:[%s7 + $0x88] sm:$0xff]
    %v578 = vld [vmem:[%s7 + $0x90] sm:$0xff]
    %v579 = vld [vmem:[%s7 + $0x98] sm:$0xff]
    %v580 = vld [vmem:[%s7 + $0xa0] sm:$0xff]
    %v581 = vld [vmem:[%s7 + $0xa8] sm:$0xff]
    %v582 = vld [vmem:[%s7 + $0xb0] sm:$0xff]
    %v583 = vld [vmem:[%s7 + $0xb8] sm:$0xff]
    %v584 = vld [vmem:[%s7 + $0xc0] sm:$0xff]
    %v585 = vld [vmem:[%s7 + $0xc8] sm:$0xff]
    %v586 = vld [vmem:[%s7 + $0xd0] sm:$0xff]
    %v587 = vld [vmem:[%s7 + $0xd8] sm:$0xff]
    %v588 = vld [vmem:[%s7 + $0xe0] sm:$0xff]
    %v589 = vld [vmem:[%s7 + $0xe8] sm:$0xff]
    %v590 = vld [vmem:[%s7 + $0xf0] sm:$0xff]
    %v591 = vld [vmem:[%s7 + $0xf8] sm:$0xff]
    %v592 = vld [vmem:[%s7 + $0x100] sm:$0xff]
    %v593 = vld [vmem:[%s7 + $0x108] sm:$0xff]
    %v594 = vld [vmem:[%s7 + $0x110] sm:$0xff]
    %v595 = vld [vmem:[%s7 + $0x118] sm:$0xff]
    %v596 = vld [vmem:[%s7 + $0x120] sm:$0xff]
    %v597 = vld [vmem:[%s7 + $0x128] sm:$0xff]
    %v598 = vld [vmem:[%s7 + $0x130] sm:$0xff]
    %v599 = vld [vmem:[%s7 + $0x138] sm:$0xff]
    %v600 = vld [vmem:[%s7 + $0x140] sm:$0xff]
    %v601 = vld [vmem:[%s7 + $0x148] sm:$0xff]
    %v602 = vld [vmem:[%s7 + $0x150] sm:$0xff]
    %v603 = vld [vmem:[%s7 + $0x158] sm:$0xff]
    %v604 = vld [vmem:[%s7 + $0x160] sm:$0xff]
    %v605 = vld [vmem:[%s7 + $0x168] sm:$0xff]
    %v606 = vld [vmem:[%s7 + $0x170] sm:$0xff]
    %v607 = vld [vmem:[%s7 + $0x178] sm:$0xff]
    %v608 = vld [vmem:[%s7 + $0x180] sm:$0xff]
    %v609 = vld [vmem:[%s7 + $0x188] sm:$0xff]
    %v610 = vld [vmem:[%s7 + $0x190] sm:$0xff]
    %v611 = vld [vmem:[%s7 + $0x198] sm:$0xff]
    %v612 = vld [vmem:[%s7 + $0x1a0] sm:$0xff]
    %v613 = vld [vmem:[%s7 + $0x1a8] sm:$0xff]
    %v614 = vld [vmem:[%s7 + $0x1b0] sm:$0xff]
    %v615 = vld [vmem:[%s7 + $0x1b8] sm:$0xff]
    %v616 = vld [vmem:[%s7 + $0x1c0] sm:$0xff]
    %v617 = vld [vmem:[%s7 + $0x1c8] sm:$0xff]
    %v618 = vld [vmem:[%s7 + $0x1d0] sm:$0xff]
    %v619 = vld [vmem:[%s7 + $0x1d8] sm:$0xff]
    %v620 = vld [vmem:[%s7 + $0x1e0] sm:$0xff]
    %v621 = vld [vmem:[%s7 + $0x1e8] sm:$0xff]
    %v622 = vld [vmem:[%s7 + $0x1f0] sm:$0xff]
    %v623 = vld [vmem:[%s7 + $0x1f8] sm:$0xff]
    %v624 = vld [vmem:[%s7 + $0x200] sm:$0xff]
    %v625 = vld [vmem:[%s7 + $0x208] sm:$0xff]
    %v626 = vld [vmem:[%s7 + $0x210] sm:$0xff]
    %v627 = vld [vmem:[%s7 + $0x218] sm:$0xff]
    %v628 = vld [vmem:[%s7 + $0x220] sm:$0xff]
    %v629 = vld [vmem:[%s7 + $0x228] sm:$0xff]
    %v630 = vld [vmem:[%s7 + $0x230] sm:$0xff]
    %v631 = vld [vmem:[%s7 + $0x238] sm:$0xff]
    %v632 = vld [vmem:[%s7 + $0x240] sm:$0xff]
    %v633 = vld [vmem:[%s7 + $0x248] sm:$0xff]
    %v634 = vld [vmem:[%s7 + $0x250] sm:$0xff]
    %v635 = vld [vmem:[%s7 + $0x258] sm:$0xff]
    %v636 = vld [vmem:[%s7 + $0x260] sm:$0xff]
    %v637 = vld [vmem:[%s7 + $0x268] sm:$0xff]
    %v638 = vld [vmem:[%s7 + $0x270] sm:$0xff]
    %v639 = vld [vmem:[%s7 + $0x278] sm:$0xff]
    %v640 = vld [vmem:[%s8] sm:$0x1]
    %v642 = vlaneseq
    %v643 = vshrl.u32 %v642, 7
    %v644 = vsub.s32 0, %v643
    %v645 = vrot.slane %v640, %v644
    %647 = vmatprep.subr.mxu0 0.0
    %648 = vmatpush1.msra.mxu0 %v560
    %649 = vmatprep.subr.mxu0 0.0
    %650 = vmatpush1.msra.mxu0 %v561
    %651 = vmatprep.subr.mxu0 0.0
    %652 = vmatpush1.msra.mxu0 %v562
    %653 = vmatprep.subr.mxu0 0.0
    %654 = vmatpush1.msra.mxu0 %v563
    %655 = vmatprep.subr.mxu0 0.0
    %656 = vmatpush1.msra.mxu0 %v564
    %657 = vmatprep.subr.mxu0 0.0
    %658 = vmatpush1.msra.mxu0 %v565
    %659 = vmatprep.subr.mxu0 0.0
    %660 = vmatpush1.msra.mxu0 %v566
    %661 = vmatprep.subr.mxu0 0.0
    %662 = vmatpush1.msra.mxu0 %v567
    %663 = vmatprep.subr.mxu0 0.0
    %664 = vmatpush1.msra.mxu0 %v568
    %665 = vmatprep.subr.mxu0 0.0
    %666 = vmatpush1.msra.mxu0 %v569
    %667 = vmatprep.subr.mxu0 0.0
    %668 = vmatpush1.msra.mxu0 %v570
    %669 = vmatprep.subr.mxu0 0.0
    %670 = vmatpush1.msra.mxu0 %v571
    %671 = vmatprep.subr.mxu0 0.0
    %672 = vmatpush1.msra.mxu0 %v572
    %673 = vmatprep.subr.mxu0 0.0
    %674 = vmatpush1.msra.mxu0 %v573
    %675 = vmatprep.subr.mxu0 0.0
    %676 = vmatpush1.msra.mxu0 %v574
    %677 = vmatprep.subr.mxu0 0.0
    %678 = vmatpush1.msra.mxu0 %v575
    %679 = vmatprep.subr.mxu0 0.0
    %680 = vmatpush1.msra.mxu0 %v576
    %681 = vmatprep.subr.mxu0 0.0
    %682 = vmatpush1.msra.mxu0 %v577
    %683 = vmatprep.subr.mxu0 0.0
    %684 = vmatpush1.msra.mxu0 %v578
    %685 = vmatprep.subr.mxu0 0.0
    %686 = vmatpush1.msra.mxu0 %v579
    %687 = vmatprep.subr.mxu0 0.0
    %688 = vmatpush1.msra.mxu0 %v580
    %689 = vmatprep.subr.mxu0 0.0
    %690 = vmatpush1.msra.mxu0 %v581
    %691 = vmatprep.subr.mxu0 0.0
    %692 = vmatpush1.msra.mxu0 %v582
    %693 = vmatprep.subr.mxu0 0.0
    %694 = vmatpush1.msra.mxu0 %v583
    %695 = vmatprep.subr.mxu0 0.0
    %696 = vmatpush1.msra.mxu0 %v584
    %697 = vmatprep.subr.mxu0 0.0
    %698 = vmatpush1.msra.mxu0 %v585
    %699 = vmatprep.subr.mxu0 0.0
    %700 = vmatpush1.msra.mxu0 %v586
    %701 = vmatprep.subr.mxu0 0.0
    %702 = vmatpush1.msra.mxu0 %v587
    %703 = vmatprep.subr.mxu0 0.0
    %704 = vmatpush1.msra.mxu0 %v588
    %705 = vmatprep.subr.mxu0 0.0
    %706 = vmatpush1.msra.mxu0 %v589
    %707 = vmatprep.subr.mxu0 0.0
    %708 = vmatpush1.msra.mxu0 %v590
    %709 = vmatprep.subr.mxu0 0.0
    %710 = vmatpush1.msra.mxu0 %v591
    %711 = vmatprep.mubr.f32.mxu0 %v556
    %712 = vmatmul.mubr.f32.gmra.mrb[0].mxu0 %v555
    %v713 = vpop.f32.mrb[0].mxu0
    %v714 = vadd.f32 %v645, %v713
    %v715 = vpop.f32.mrb[0].mxu0
    %716 = vdwg.mxu0
    %717 = vmatprep.subr.mxu0 0.0
    %718 = vmatpush1.msra.mxu0 %v592
    %719 = vmatprep.subr.mxu0 0.0
    %720 = vmatpush1.msra.mxu0 %v593
    %721 = vmatprep.subr.mxu0 0.0
    %722 = vmatpush1.msra.mxu0 %v594
    %723 = vmatprep.subr.mxu0 0.0
    %724 = vmatpush1.msra.mxu0 %v595
    %725 = vmatprep.subr.mxu0 0.0
    %726 = vmatpush1.msra.mxu0 %v596
    %727 = vmatprep.subr.mxu0 0.0
    %728 = vmatpush1.msra.mxu0 %v597
    %729 = vmatprep.subr.mxu0 0.0
    %730 = vmatpush1.msra.mxu0 %v598
    %731 = vmatprep.subr.mxu0 0.0
    %732 = vmatpush1.msra.mxu0 %v599
    %733 = vmatprep.subr.mxu0 0.0
    %734 = vmatpush1.msra.mxu0 %v600
    %735 = vmatprep.subr.mxu0 0.0
    %736 = vmatpush1.msra.mxu0 %v601
    %737 = vmatprep.subr.mxu0 0.0
    %738 = vmatpush1.msra.mxu0 %v602
    %739 = vmatprep.subr.mxu0 0.0
    %740 = vmatpush1.msra.mxu0 %v603
    %741 = vmatprep.subr.mxu0 0.0
    %742 = vmatpush1.msra.mxu0 %v604
    %743 = vmatprep.subr.mxu0 0.0
    %744 = vmatpush1.msra.mxu0 %v605
    %745 = vmatprep.subr.mxu0 0.0
    %746 = vmatpush1.msra.mxu0 %v606
    %747 = vmatprep.subr.mxu0 0.0
    %748 = vmatpush1.msra.mxu0 %v607
    %749 = vmatprep.subr.mxu0 0.0
    %750 = vmatpush1.msra.mxu0 %v608
    %751 = vmatprep.subr.mxu0 0.0
    %752 = vmatpush1.msra.mxu0 %v609
    %753 = vmatprep.subr.mxu0 0.0
    %754 = vmatpush1.msra.mxu0 %v610
    %755 = vmatprep.subr.mxu0 0.0
    %756 = vmatpush1.msra.mxu0 %v611
    %757 = vmatprep.subr.mxu0 0.0
    %758 = vmatpush1.msra.mxu0 %v612
    %759 = vmatprep.subr.mxu0 0.0
    %760 = vmatpush1.msra.mxu0 %v613
    %761 = vmatprep.subr.mxu0 0.0
    %762 = vmatpush1.msra.mxu0 %v614
    %763 = vmatprep.subr.mxu0 0.0
    %764 = vmatpush1.msra.mxu0 %v615
    %765 = vmatprep.subr.mxu0 0.0
    %766 = vmatpush1.msra.mxu0 %v616
    %767 = vmatprep.subr.mxu0 0.0
    %768 = vmatpush1.msra.mxu0 %v617
    %769 = vmatprep.subr.mxu0 0.0
    %770 = vmatpush1.msra.mxu0 %v618
    %771 = vmatprep.subr.mxu0 0.0
    %772 = vmatpush1.msra.mxu0 %v619
    %773 = vmatprep.subr.mxu0 0.0
    %774 = vmatpush1.msra.mxu0 %v620
    %775 = vmatprep.subr.mxu0 0.0
    %776 = vmatpush1.msra.mxu0 %v621
    %777 = vmatprep.subr.mxu0 0.0
    %778 = vmatpush1.msra.mxu0 %v622
    %779 = vmatprep.subr.mxu0 0.0
    %780 = vmatpush1.msra.mxu0 %v623
    %781 = vmatprep.mubr.f32.mxu0 %v558
    %782 = vmatmul.mubr.f32.gmra.mrb[0].mxu0 %v557
    %v783 = vpop.f32.mrb[0].mxu0
    %v784 = vadd.f32 %v714, %v783
    %v785 = vpop.f32.mrb[0].mxu0
    %786 = vdwg.mxu0
    %787 = vmatprep.subr.mxu0 0.0
    %788 = vmatpush1.msra.mxu0 %v624
    %789 = vmatprep.subr.mxu0 0.0
    %790 = vmatpush1.msra.mxu0 %v625
    %791 = vmatprep.subr.mxu0 0.0
    %792 = vmatpush1.msra.mxu0 %v626
    %793 = vmatprep.subr.mxu0 0.0
    %794 = vmatpush1.msra.mxu0 %v627
    %795 = vmatprep.subr.mxu0 0.0
    %796 = vmatpush1.msra.mxu0 %v628
    %797 = vmatprep.subr.mxu0 0.0
    %798 = vmatpush1.msra.mxu0 %v629
    %799 = vmatprep.subr.mxu0 0.0
    %800 = vmatpush1.msra.mxu0 %v630
    %801 = vmatprep.subr.mxu0 0.0
    %802 = vmatpush1.msra.mxu0 %v631
    %803 = vmatprep.subr.mxu0 0.0
    %804 = vmatpush1.msra.mxu0 %v632
    %805 = vmatprep.subr.mxu0 0.0
    %806 = vmatpush1.msra.mxu0 %v633
    %807 = vmatprep.subr.mxu0 0.0
    %808 = vmatpush1.msra.mxu0 %v634
    %809 = vmatprep.subr.mxu0 0.0
    %810 = vmatpush1.msra.mxu0 %v635
    %811 = vmatprep.subr.mxu0 0.0
    %812 = vmatpush1.msra.mxu0 %v636
    %813 = vmatprep.subr.mxu0 0.0
    %814 = vmatpush1.msra.mxu0 %v637
    %815 = vmatprep.subr.mxu0 0.0
    %816 = vmatpush1.msra.mxu0 %v638
    %817 = vmatprep.subr.mxu0 0.0
    %818 = vmatpush1.msra.mxu0 %v639
    %819 = vmatprep.subr.mxu0 0.0
    %820 = vmatpush1.msra.mxu0 0.0
    %821 = vmatprep.subr.mxu0 0.0
    %822 = vmatpush1.msra.mxu0 0.0
    %823 = vmatprep.subr.mxu0 0.0
    %824 = vmatpush1.msra.mxu0 0.0
    %825 = vmatprep.subr.mxu0 0.0
    %826 = vmatpush1.msra.mxu0 0.0
    %827 = vmatprep.subr.mxu0 0.0
    %828 = vmatpush1.msra.mxu0 0.0
    %829 = vmatprep.subr.mxu0 0.0
    %830 = vmatpush1.msra.mxu0 0.0
    %831 = vmatprep.subr.mxu0 0.0
    %832 = vmatpush1.msra.mxu0 0.0
    %833 = vmatprep.subr.mxu0 0.0
    %834 = vmatpush1.msra.mxu0 0.0
    %835 = vmatprep.subr.mxu0 0.0
    %836 = vmatpush1.msra.mxu0 0.0
    %837 = vmatprep.subr.mxu0 0.0
    %838 = vmatpush1.msra.mxu0 0.0
    %839 = vmatprep.subr.mxu0 0.0
    %840 = vmatpush1.msra.mxu0 0.0
    %841 = vmatprep.subr.mxu0 0.0
    %842 = vmatpush1.msra.mxu0 0.0
    %843 = vmatprep.subr.mxu0 0.0
    %844 = vmatpush1.msra.mxu0 0.0
    %845 = vmatprep.subr.mxu0 0.0
    %846 = vmatpush1.msra.mxu0 0.0
    %847 = vmatprep.subr.mxu0 0.0
    %848 = vmatpush1.msra.mxu0 0.0
    %849 = vmatprep.subr.mxu0 0.0
    %850 = vmatpush1.msra.mxu0 0.0
    %851 = vmatprep.mubr.f32.mxu0 0.0
    %852 = vmatmul.mubr.f32.gmra.mrb[0].mxu0 %v559
    %v853 = vpop.f32.mrb[0].mxu0
    %v854 = vadd.f32 %v784, %v853
    %v855 = vpop.f32.mrb[0].mxu0
    %856 = vdwg.mxu0
    %vm857 = vcmask 326656
    %858 = vst.msk [vmem:[#allocation5] sm:$0xff] %vm857, %v854
    // Predicated region
    $region42: #{tpu_custom_call.1} parent=1 // pred_check
      _
    $region43: #{tpu_custom_call.1} parent=1 // pred_check_branch
      %860 = sbr.rel (0) target = $region45
    $region44: #{tpu_custom_call.1} parent=1 // pred_region
      %s862 = ssub.s32 128, 128
      %863 = vsyncadd [#allocation4], %s862
      %s865 = sshll.u32 [#allocation5], 4
      %s866 = int_to_ptr.vmem [resolvable:$true] %s865
      %868 = dma.vmem_to_hbm [thread:$0]  %s866, 128, %s9, [#allocation4]
    $region45: #{tpu_custom_call.1} parent=1 // pred_fallthru
      _
    // Predicated region
    $region46: #{tpu_custom_call.1} parent=1 // pred_check
      _
    $region47: #{tpu_custom_call.1} parent=1 // pred_check_branch
      %870 = sbr.rel (0) target = $region49
    $region48: #{tpu_custom_call.1} parent=1 // pred_region
      %871 = dma.done [#allocation4], 128
    $region49: #{tpu_custom_call.1} parent=1 // pred_fallthru
      _
    %872 = vsyncpa [#allocation3], 1
    %873 = vsyncpa [#allocation4], 1

</llo_original>
